<compile_context>
chip_gen: v7x
topology: tpu7x:2x2x1
jax: 0.10.0
libtpu: 0.0.40
codegen_flags: <defaults>
</compile_context>

<pallas_src>
import functools

import jax
import jax.numpy as jnp
from jax.experimental import pallas as pl
from jax.experimental.pallas import tpu as pltpu

LANES = 128
SUBLANES = 8
CHUNK_ROWS = 256                # in-kernel streaming chunk: 256*128*4B = 128 KiB f32
TARGET_BLOCK_BYTES = 4 << 20    # ~4 MiB per input block per grid step


def _round_up(x, m):
    return ((x + m - 1) // m) * m


def _cdiv(a, b):
    return (a + b - 1) // b


def _loss_valid_kernel(out_ref, lab_ref, res_ref, *, tile_rows, chunk_rows,
                       n_rows, need_mask):
    i = pl.program_id(0)
    n_chunks = tile_rows // chunk_rows
    groups = chunk_rows // SUBLANES

    def _unmasked_reduce():
        def body(g, acc):
            base = pl.multiple_of(g * chunk_rows, chunk_rows)
            o = out_ref[pl.ds(base, chunk_rows), :].astype(jnp.float32)
            l = lab_ref[pl.ds(base, chunk_rows), :].astype(jnp.float32)
            # |o - l| / l ; reciprocal runs on the EUP slot (approx=False keeps
            # it numerically ~identical to the divide).
            err = jnp.abs(o - l) * pl.reciprocal(l, approx=False)
            # (chunk_rows, 128) -> (8, 128): groups of 8 rows are sublane-tile
            # aligned, so this is pure VPU vreg adds, no relayout, and only a
            # chunk's worth of intermediates is ever live.
            return acc + jnp.sum(err.reshape(groups, SUBLANES, LANES), axis=0)

        res_ref[...] = jax.lax.fori_loop(
            0, n_chunks, body, jnp.zeros((SUBLANES, LANES), jnp.float32))

    if not need_mask:
        _unmasked_reduce()
        return

    is_last = i == pl.num_programs(0) - 1

    @pl.when(jnp.logical_not(is_last))
    def _():
        _unmasked_reduce()

    @pl.when(is_last)
    def _():
        def body(g, acc):
            base = pl.multiple_of(g * chunk_rows, chunk_rows)
            o = out_ref[pl.ds(base, chunk_rows), :].astype(jnp.float32)
            l = lab_ref[pl.ds(base, chunk_rows), :].astype(jnp.float32)
            row_ids = (i * tile_rows + base
                       + jax.lax.broadcasted_iota(jnp.int32,
                                                  (chunk_rows, LANES), 0))
            valid = row_ids < n_rows
            # Keep this a select: garbage rows past n_rows may produce inf/NaN
            # through the reciprocal; the select drops them (a multiply-by-0
            # mask would propagate NaN).
            err = jnp.where(
                valid,
                jnp.abs(o - l) * pl.reciprocal(l, approx=False),
                jnp.float32(0.0))
            return acc + jnp.sum(err.reshape(groups, SUBLANES, LANES), axis=0)

        res_ref[...] = jax.lax.fori_loop(
            0, n_chunks, body, jnp.zeros((SUBLANES, LANES), jnp.float32))


def _choose_tiling(n_rows, itemsize):
    """Pick (tile_rows, chunk_rows, n_blocks, need_mask). n_rows is a mult of 8."""
    chunk_rows = min(CHUNK_ROWS, n_rows)              # multiple of 8
    rows_for_target = max(1, TARGET_BLOCK_BYTES // (LANES * itemsize))
    target_rows = max(chunk_rows, (rows_for_target // chunk_rows) * chunk_rows)
    # Keep >= 2 blocks whenever possible so v7x's two TensorCores can split
    # the stream (v5e/v6e are unaffected).
    half_rows = _round_up(_cdiv(n_rows, 2), chunk_rows)
    tile_rows = max(chunk_rows,
                    min(target_rows, half_rows, _round_up(n_rows, chunk_rows)))
    n_blocks = _cdiv(n_rows, tile_rows)
    need_mask = (n_blocks * tile_rows != n_rows)
    return tile_rows, chunk_rows, n_blocks, need_mask


def loss_valid(outputs, label):
    """Computes mean(|outputs - label| / label) over all elements."""
    assert outputs.shape == label.shape
    n_valid = int(outputs.size)
    assert n_valid > 0

    out_flat = jnp.ravel(outputs)   # free for contiguous input; dtype kept
    lab_flat = jnp.ravel(label)

    # The kernel handles full (8, 128)-aligned row groups; the < 1024-element
    # remainder goes through plain JAX (negligible cost).
    n_rows = (n_valid // (SUBLANES * LANES)) * SUBLANES
    n_bulk = n_rows * LANES

    total_sum = jnp.float32(0.0)

    if n_rows > 0:
        # Pure view/bitcast when the input is contiguous.
        out2d = out_flat[:n_bulk].reshape(n_rows, LANES)
        lab2d = lab_flat[:n_bulk].reshape(n_rows, LANES)

        itemsize = jnp.dtype(outputs.dtype).itemsize
        tile_rows, chunk_rows, n_blocks, need_mask = _choose_tiling(
            n_rows, itemsize)

        block_bytes = tile_rows * LANES * itemsize
        # 2 inputs x 2 pipeline buffers x block + double-buffered (8,128) f32
        # output + slack for internal scratch.  <= ~21 MiB, fits every
        # generation's scoped VMEM budget once explicitly requested.
        vmem_limit = 2 * 2 * block_bytes + 2 * SUBLANES * LANES * 4 + (4 << 20)
        vmem_limit = max(int(vmem_limit), 16 << 20)

        kernel = functools.partial(
            _loss_valid_kernel,
            tile_rows=tile_rows, chunk_rows=chunk_rows,
            n_rows=n_rows, need_mask=need_mask)

        partials = pl.pallas_call(
            kernel,
            out_shape=jax.ShapeDtypeStruct((n_blocks * SUBLANES, LANES),
                                           jnp.float32),
            grid_spec=pltpu.PrefetchScalarGridSpec(
                num_scalar_prefetch=0,
                grid=(n_blocks,),
                in_specs=[
                    pl.BlockSpec((tile_rows, LANES), lambda i: (i, 0)),
                    pl.BlockSpec((tile_rows, LANES), lambda i: (i, 0)),
                ],
                out_specs=pl.BlockSpec((SUBLANES, LANES), lambda i: (i, 0)),
            ),
            compiler_params=pltpu.CompilerParams(
                # Every grid step writes its own output block and carries no
                # state, so the axis is truly parallel (v7x megacore splits it).
                dimension_semantics=("parallel",),
                vmem_limit_bytes=vmem_limit),
        )(out2d, lab2d)

        total_sum = total_sum + jnp.sum(partials)

    if n_bulk < n_valid:
        # Sub-(8x128) ragged remainder: plain JAX, negligible cost.
        o_t = out_flat[n_bulk:].astype(jnp.float32)
        l_t = lab_flat[n_bulk:].astype(jnp.float32)
        total_sum = total_sum + jnp.sum(jnp.abs(o_t - l_t) / l_t)

    return total_sum / jnp.float32(n_valid)


if __name__ == "__main__":
    key = jax.random.PRNGKey(0)
    k1, k2 = jax.random.split(key)

    # Small NCHW-shaped inputs (batch=2, channels=4, spatial=16).
    shape = (2, 4, 16, 16)
    outputs = jax.random.uniform(k1, shape, jnp.float32, minval=0.5, maxval=2.0)
    label = jax.random.uniform(k2, shape, jnp.float32, minval=0.5, maxval=2.0)

    result = loss_valid(outputs, label)
    result = jax.block_until_ready(result)

    # Pure-JAX reference check.
    ref = jnp.mean(jnp.abs(outputs - label) / label)
    assert jnp.allclose(result, ref, rtol=1e-5, atol=1e-6), (result, ref)

    print("KERNEL_OK")
</pallas_src>

<mosaic_0001>
module attributes {stable_mosaic.version = 11 : i64} {
  func.func @_loss_valid_kernel(%arg0: i32, %arg1: memref<16x128xf32, #tpu.memory_space<vmem>>, %arg2: memref<16x128xf32, #tpu.memory_space<vmem>>, %arg3: memref<8x128xf32, #tpu.memory_space<vmem>>) attributes {dimension_semantics = [#tpu.dimension_semantics<parallel>], iteration_bounds = array<i64: 1>, scalar_prefetch = 0 : i64, scratch_operands = 0 : i64, tpu.core_type = #tpu.core_type<tc>, window_params = [{transform_indices = @transform_0, window_bounds = array<i64: 16, 128>}, {transform_indices = @transform_1, window_bounds = array<i64: 16, 128>}, {transform_indices = @transform_2, window_bounds = array<i64: 8, 128>}]} {
    %cst = arith.constant 0.000000e+00 : f32
    %0 = vector.broadcast %cst : f32 to vector<8x128xf32>
    %c0_i32 = arith.constant 0 : i32
    %c16_i32 = arith.constant 16 : i32
    %1 = arith.muli %c0_i32, %c16_i32 : i32
    %2 = tpu.assume_multiple %1, 16 : i32
    %3 = arith.index_cast %2 : i32 to index
    %c0 = arith.constant 0 : index
    %4 = vector.load %arg1[%3, %c0] : memref<16x128xf32, #tpu.memory_space<vmem>>, vector<16x128xf32>
    %5 = arith.index_cast %2 : i32 to index
    %c0_0 = arith.constant 0 : index
    %6 = vector.load %arg2[%5, %c0_0] : memref<16x128xf32, #tpu.memory_space<vmem>>, vector<16x128xf32>
    %7 = arith.subf %4, %6 : vector<16x128xf32>
    %8 = math.absf %7 : vector<16x128xf32>
    %9 = tpu.reciprocal %6 : vector<16x128xf32> -> vector<16x128xf32>
    %10 = arith.mulf %8, %9 : vector<16x128xf32>
    %11 = vector.shape_cast %10 : vector<16x128xf32> to vector<2x8x128xf32>
    %cst_1 = arith.constant dense<0.000000e+00> : vector<8x128xf32>
    %12 = vector.multi_reduction <add>, %11, %cst_1 [0] : vector<2x8x128xf32> to vector<8x128xf32>
    %13 = arith.addf %0, %12 : vector<8x128xf32>
    %c1_i32 = arith.constant 1 : i32
    %c0_2 = arith.constant 0 : index
    %c0_3 = arith.constant 0 : index
    %14 = vector.load %arg3[%c0_2, %c0_3] : memref<8x128xf32, #tpu.memory_space<vmem>>, vector<8x128xf32>
    tpu.vector_store %arg3[%c0_2, %c0_3], %13 {strides = array<i32>} : memref<8x128xf32, #tpu.memory_space<vmem>>, vector<8x128xf32>,
    return
  }
  func.func @transform_0(%arg0: i32) -> (i32, i32) {
    %c0_i32 = arith.constant 0 : i32
    %c0_i32_0 = arith.constant 0 : i32
    return %arg0, %c0_i32 : i32, i32
  }
  func.func @transform_1(%arg0: i32) -> (i32, i32) {
    %c0_i32 = arith.constant 0 : i32
    %c0_i32_0 = arith.constant 0 : i32
    return %arg0, %c0_i32 : i32, i32
  }
  func.func @transform_2(%arg0: i32) -> (i32, i32) {
    %c0_i32 = arith.constant 0 : i32
    %c0_i32_0 = arith.constant 0 : i32
    return %arg0, %c0_i32 : i32, i32
  }
}

</mosaic_0001>

<llo_original>
// kernel: tpu_custom_call.1
$region0: #{tpu_custom_call.1}
  #allocation0 [shape = 'u32[]', space=smem, size = 0x4, offset = 0x4, fixed_abs, tag = 'smem constant byte address 0x4 - core index']
  #allocation1 [shape = 'u32[144,128]{1,0:T(1,128)}', space=vmem, size = 0x12000, scoped, tag = 'internal scratch']
  %s0 = inlined_call_operand.hbm [shape: f32[16,128], index: 0, kind: input, shape index: {}]
  %s1 = inlined_call_operand.hbm [shape: f32[16,128], index: 1, kind: input, shape index: {}]
  %s2 = inlined_call_operand.hbm [shape: f32[8,128], index: 2, kind: output, shape index: {}]
  %s3 = sld [smem:[#allocation0]]
  $region26: #{tpu_custom_call.1} parent=0
    _
  %s5 = ssub.s32 1, %s3
  %s6 = scalar_select 0, %s5, %s3
  $region1: #{tpu_custom_call.1} parent=0
    #allocation2 [shape = 'u8[8192]{0}', space=vmem, size = 0x2000, scoped, tag = 'input window, operand 0, single buffered']
    #allocation3 [shape = 's32[1]{0}', space=sflag, size = 0x4, scoped, tag = 'scoped memory for tpu_custom_call.1']
    #allocation4 [shape = 's32[1]{0}', space=sflag, size = 0x4, scoped, tag = 'scoped memory for tpu_custom_call.1']
    #allocation5 [shape = 'u8[8192]{0}', space=vmem, size = 0x2000, scoped, tag = 'input window, operand 1, single buffered']
    #allocation6 [shape = 's32[1]{0}', space=sflag, size = 0x4, scoped, tag = 'scoped memory for tpu_custom_call.1']
    #allocation7 [shape = 'u8[4096]{0}', space=vmem, size = 0x1000, scoped, tag = 'output window, operand 0, single buffered']
    %7 = vsyncpa [#allocation3], 0
    %8 = vsyncpa [#allocation6], 0
    %9 = vsyncpa [#allocation4], 0
    // Predicated region
    $region2: #{tpu_custom_call.1} parent=1 // pred_check
      _
    $region3: #{tpu_custom_call.1} parent=1 // pred_check_branch
      %11 = sbr.rel (0) target = $region5
    $region4: #{tpu_custom_call.1} parent=1 // pred_region
      %s13 = ssub.s32 256, 256
      %14 = vsyncadd [#allocation3], %s13
      %s15 = sshll.u32 [#allocation2], 4
      %s16 = int_to_ptr.vmem [resolvable:$true] %s15
      %21 = dma.hbm_to_vmem [thread:$0]  %s0, 256, %s16, [#allocation3], 128, 128, 8
    $region5: #{tpu_custom_call.1} parent=1 // pred_fallthru
      _
    // Predicated region
    $region6: #{tpu_custom_call.1} parent=1 // pred_check
      _
    $region7: #{tpu_custom_call.1} parent=1 // pred_check_branch
      %23 = sbr.rel (0) target = $region9
    $region8: #{tpu_custom_call.1} parent=1 // pred_region
      %s25 = ssub.s32 256, 256
      %26 = vsyncadd [#allocation6], %s25
      %s27 = sshll.u32 [#allocation5], 4
      %s28 = int_to_ptr.vmem [resolvable:$true] %s27
      %33 = dma.hbm_to_vmem [thread:$0]  %s1, 256, %s28, [#allocation6], 128, 128, 8
    $region9: #{tpu_custom_call.1} parent=1 // pred_fallthru
      _
    // Predicated region
    $region10: #{tpu_custom_call.1} parent=1 // pred_check
      _
    $region11: #{tpu_custom_call.1} parent=1 // pred_check_branch
      %35 = sbr.rel (0) target = $region13
    $region12: #{tpu_custom_call.1} parent=1 // pred_region
      %36 = dma.done [#allocation3], 256
    $region13: #{tpu_custom_call.1} parent=1 // pred_fallthru
      _
    // Predicated region
    $region14: #{tpu_custom_call.1} parent=1 // pred_check
      _
    $region15: #{tpu_custom_call.1} parent=1 // pred_check_branch
      %38 = sbr.rel (0) target = $region17
    $region16: #{tpu_custom_call.1} parent=1 // pred_region
      %39 = dma.done [#allocation6], 256
    $region17: #{tpu_custom_call.1} parent=1 // pred_fallthru
      _
    %v40 = vld [vmem:[#allocation2] sm:$0xff]
    %v41 = vld [vmem:[#allocation2 + $0x8] sm:$0xff]
    %v42 = vld [vmem:[#allocation5] sm:$0xff]
    %v43 = vld [vmem:[#allocation5 + $0x8] sm:$0xff]
    %v44 = vsub.f32 %v40, %v42
    %v45 = vsub.f32 %v41, %v43
    %v46 = vand.u32 2147483647, %v44
    %v47 = vand.u32 2147483647, %v45
    %v48 = vrcp.pop %v42
    %v49 = vrcp.pop %v43
    %v50 = vmul.f32 %v46, %v48
    %v51 = vmul.f32 %v47, %v49
    %v52 = vadd.f32 %v50, %v51
    %v53 = vadd.f32 %v52, 0.0
    %54 = vst [vmem:[#allocation7] sm:$0xff] %v53
    // Predicated region
    $region18: #{tpu_custom_call.1} parent=1 // pred_check
      _
    $region19: #{tpu_custom_call.1} parent=1 // pred_check_branch
      %56 = sbr.rel (0) target = $region21
    $region20: #{tpu_custom_call.1} parent=1 // pred_region
      %s58 = ssub.s32 128, 128
      %59 = vsyncadd [#allocation4], %s58
      %s61 = sshll.u32 [#allocation7], 4
      %s62 = int_to_ptr.vmem [resolvable:$true] %s61
      %64 = dma.vmem_to_hbm [thread:$0]  %s62, 128, %s2, [#allocation4]
    $region21: #{tpu_custom_call.1} parent=1 // pred_fallthru
      _
    // Predicated region
    $region22: #{tpu_custom_call.1} parent=1 // pred_check
      _
    $region23: #{tpu_custom_call.1} parent=1 // pred_check_branch
      %66 = sbr.rel (0) target = $region25
    $region24: #{tpu_custom_call.1} parent=1 // pred_region
      %67 = dma.done [#allocation4], 128
    $region25: #{tpu_custom_call.1} parent=1 // pred_fallthru
      _
    %68 = vsyncpa [#allocation3], 1
    %69 = vsyncpa [#allocation6], 1
    %70 = vsyncpa [#allocation4], 1

</llo_original>
